<compile_context>
chip_gen: v5e
topology: v5e:2x2
jax: 0.10.0
libtpu: 0.0.40
codegen_flags: <defaults>
</compile_context>

<pallas_src>
import jax
import jax.numpy as jnp
from jax import lax
from jax.experimental import pallas as pl
from jax.experimental.pallas import tpu as pltpu


def _round_up(x: int, m: int) -> int:
    return ((x + m - 1) // m) * m


def _make_encoder_kernel(tk: int, k_rem: int):
    """Kernel for one (tm, tn) output tile; grid = (M/tm, N/tn, K/tk).

    x_ref: (tm, tk)    w_ref: (tn, tk)  -- native PyTorch (N, K) layout
    b_ref: (1, tn)     o_ref: (tm, tn) float32, resident across the K axis.
    k_rem = K % tk (static): if nonzero, the last K block reads past the end
    of X/W, so the tail columns are zeroed before the matmul (exact reduction
    without any wrapper-side K padding).
    """

    def kernel(x_ref, w_ref, b_ref, o_ref):
        k = pl.program_id(2)

        x = x_ref[...]
        w = w_ref[...]
        if k_rem:  # static: only emitted when K is not a multiple of tk
            lim = jnp.where(k == pl.num_programs(2) - 1, k_rem, tk)
            x = jnp.where(lax.broadcasted_iota(jnp.int32, x.shape, 1) < lim,
                          x, jnp.zeros_like(x))
            w = jnp.where(lax.broadcasted_iota(jnp.int32, w.shape, 1) < lim,
                          w, jnp.zeros_like(w))

        # Contract on K (dim 1 of both operands) -> (tm, tn); W stays (N, K).
        part = lax.dot_general(
            x, w,
            dimension_numbers=(((1,), (1,)), ((), ())),
            preferred_element_type=jnp.float32,
        )

        @pl.when(k == 0)
        def _():
            # Fold the bias into the accumulator init: no separate epilogue.
            o_ref[...] = jnp.broadcast_to(b_ref[...], o_ref.shape).astype(
                o_ref.dtype)

        o_ref[...] += part

    return kernel


def _tile_caps():
    """Per-generation tile caps: larger K tiles where 128 MiB VMEM allows."""
    try:
        info = pltpu.get_tpu_info()
        vmem_cap = int(getattr(info, "vmem_capacity_bytes", 64 * 1024 * 1024))
    except Exception:
        vmem_cap = 64 * 1024 * 1024
    if vmem_cap >= 96 * 1024 * 1024:      # v5e / v6e class (128 MiB VMEM)
        return 512, 512, 1024
    return 512, 512, 512                  # v7x class (64 MiB VMEM, 2 TCs)


def encoder_forward(x, weight, bias, *, tm_max=None, tn_max=None, tk_max=None,
                    use_bf16=False):
    """x: (M, K), weight: (N, K) (PyTorch layout), bias: (N,) -> (M, N) f32."""
    M, K = x.shape
    N, K2 = weight.shape
    assert K == K2, "input_features mismatch"
    assert bias.shape == (N,)

    cap_m, cap_n, cap_k = _tile_caps()
    tm_max = tm_max or cap_m
    tn_max = tn_max or cap_n
    tk_max = tk_max or cap_k

    if use_bf16:
        # Opt-in: halves X/W HBM bytes + fast bf16 MXU path; f32 accumulation.
        x = x.astype(jnp.bfloat16)
        weight = weight.astype(jnp.bfloat16)

    # Tile sizes. Legality: tm multiple of 8 (or >= M), tn multiple of 128
    # (or >= N), tk = K when it fits (full-dim blocks are always legal),
    # otherwise a multiple of 128 with the in-kernel K-tail mask.
    tm = min(tm_max, _round_up(M, 8))
    tn = min(tn_max, _round_up(N, 128))
    tk = K if K <= tk_max else tk_max
    k_rem = K % tk

    # Keep >= 2 blocks along a parallel axis when the grid would otherwise
    # collapse to a single block (so both v7x TensorCores get work).
    if pl.cdiv(M, tm) == 1 and pl.cdiv(N, tn) == 1 and tn >= 256:
        tn //= 2

    grid = (pl.cdiv(M, tm), pl.cdiv(N, tn), pl.cdiv(K, tk))

    bias2d = bias.reshape(1, N)

    in_itemsize = jnp.dtype(x.dtype).itemsize
    # Double-buffered X/W/bias tiles + the resident f32 output tile, + slack.
    vmem_bytes = 2 * (tm * tk + tn * tk + tn) * in_itemsize + 2 * tm * tn * 4
    vmem_limit = int(min(max(2 * vmem_bytes, 32 * 1024 * 1024),
                         48 * 1024 * 1024))

    cost = pl.CostEstimate(
        flops=2 * M * N * K,
        transcendentals=0,
        bytes_accessed=(M * K + N * K) * in_itemsize + 4 * (M * N + N),
    )

    return pl.pallas_call(
        _make_encoder_kernel(tk, k_rem),
        out_shape=jax.ShapeDtypeStruct((M, N), jnp.float32),
        grid=grid,
        in_specs=[
            pl.BlockSpec((tm, tk), lambda i, j, k: (i, k)),   # X tile
            pl.BlockSpec((tn, tk), lambda i, j, k: (j, k)),   # W tile (N, K)
            pl.BlockSpec((1, tn), lambda i, j, k: (0, j)),    # bias slice
        ],
        out_specs=pl.BlockSpec((tm, tn), lambda i, j, k: (i, j)),
        compiler_params=pltpu.CompilerParams(
            dimension_semantics=("parallel", "parallel", "arbitrary"),
            vmem_limit_bytes=vmem_limit,
        ),
        cost_estimate=cost,
    )(x, weight, bias2d)


if __name__ == "__main__":
    key = jax.random.PRNGKey(0)
    k_x, k_w, k_b, k_x2, k_w2, k_b2 = jax.random.split(key, 6)

    # Small shapes consistent with the module: batch=8, in=32, out=16.
    batch, input_features, output_features = 8, 32, 16
    x = jax.random.uniform(k_x, (batch, input_features), dtype=jnp.float32)
    weight = jax.random.uniform(
        k_w, (output_features, input_features), dtype=jnp.float32)
    bias = jax.random.uniform(k_b, (output_features,), dtype=jnp.float32)

    y = jax.block_until_ready(encoder_forward(x, weight, bias))
    y_ref = x @ weight.T + bias
    assert y.shape == (batch, output_features)
    assert jnp.allclose(y, y_ref, atol=1e-5, rtol=1e-5)

    # Ragged multi-K-step case exercising the in-kernel K-tail mask
    # (tk_max=128 forces tk=128 with a 72-column remainder) and ragged M/N.
    M2, K2, N2 = 24, 200, 56
    x2 = jax.random.uniform(k_x2, (M2, K2), dtype=jnp.float32)
    w2 = jax.random.uniform(k_w2, (N2, K2), dtype=jnp.float32)
    b2 = jax.random.uniform(k_b2, (N2,), dtype=jnp.float32)
    y2 = jax.block_until_ready(encoder_forward(x2, w2, b2, tk_max=128))
    y2_ref = jnp.dot(x2, w2.T, precision=jax.lax.Precision.HIGHEST) + b2
    assert y2.shape == (M2, N2)
    assert jnp.allclose(y2, y2_ref, atol=1e-2, rtol=1e-4)

    print("KERNEL_OK")
</pallas_src>

<mosaic_0001>
module attributes {stable_mosaic.version = 11 : i64} {
  func.func @kernel(%arg0: i32, %arg1: i32, %arg2: i32, %arg3: memref<8x32xf32, #tpu.memory_space<vmem>>, %arg4: memref<128x32xf32, #tpu.memory_space<vmem>>, %arg5: memref<1x128xf32, #tpu.memory_space<vmem>>, %arg6: memref<8x128xf32, #tpu.memory_space<vmem>>) attributes {dimension_semantics = [#tpu.dimension_semantics<parallel>, #tpu.dimension_semantics<parallel>, #tpu.dimension_semantics<arbitrary>], iteration_bounds = array<i64: 1, 1, 1>, scalar_prefetch = 0 : i64, scratch_operands = 0 : i64, tpu.core_type = #tpu.core_type<tc>, window_params = [{transform_indices = @transform_0, window_bounds = array<i64: 8, 32>}, {transform_indices = @transform_1, window_bounds = array<i64: 128, 32>}, {transform_indices = @transform_2, window_bounds = array<i64: 1, 128>}, {transform_indices = @transform_3, window_bounds = array<i64: 8, 128>}]} {
    %c0 = arith.constant 0 : index
    %c0_0 = arith.constant 0 : index
    %0 = vector.load %arg3[%c0, %c0_0] : memref<8x32xf32, #tpu.memory_space<vmem>>, vector<8x32xf32>
    %c0_1 = arith.constant 0 : index
    %c0_2 = arith.constant 0 : index
    %1 = vector.load %arg4[%c0_1, %c0_2] : memref<128x32xf32, #tpu.memory_space<vmem>>, vector<128x32xf32>
    %cst = arith.constant dense<0.000000e+00> : vector<8x128xf32>
    %2 = tpu.matmul %0, %1, %cst {dimension_numbers = #tpu.dot_dimension_numbers<[1], [1], [0], [0], [0, 0, 1, 0], [], []>} : vector<8x32xf32>, vector<128x32xf32>, vector<8x128xf32> -> vector<8x128xf32>
    %c0_i32 = arith.constant 0 : i32
    %3 = arith.cmpi eq, %arg2, %c0_i32 : i32
    %4 = arith.extui %3 : i1 to i32
    %c0_i32_3 = arith.constant 0 : i32
    %5 = arith.cmpi ne, %4, %c0_i32_3 : i32
    scf.if %5 {
      %c0_8 = arith.constant 0 : index
      %c0_9 = arith.constant 0 : index
      %9 = vector.load %arg5[%c0_8, %c0_9] : memref<1x128xf32, #tpu.memory_space<vmem>>, vector<1x128xf32>
      %10 = vector.shape_cast %9 : vector<1x128xf32> to vector<1x128xf32>
      %11 = vector.broadcast %10 : vector<1x128xf32> to vector<8x128xf32>
      %c0_10 = arith.constant 0 : index
      %c0_11 = arith.constant 0 : index
      %12 = vector.load %arg6[%c0_10, %c0_11] : memref<8x128xf32, #tpu.memory_space<vmem>>, vector<8x128xf32>
      tpu.vector_store %arg6[%c0_10, %c0_11], %11 {strides = array<i32>} : memref<8x128xf32, #tpu.memory_space<vmem>>, vector<8x128xf32>,
    } else {
    }
    %c0_4 = arith.constant 0 : index
    %c0_5 = arith.constant 0 : index
    %6 = vector.load %arg6[%c0_4, %c0_5] : memref<8x128xf32, #tpu.memory_space<vmem>>, vector<8x128xf32>
    %7 = arith.addf %6, %2 : vector<8x128xf32>
    %c0_6 = arith.constant 0 : index
    %c0_7 = arith.constant 0 : index
    %8 = vector.load %arg6[%c0_6, %c0_7] : memref<8x128xf32, #tpu.memory_space<vmem>>, vector<8x128xf32>
    tpu.vector_store %arg6[%c0_6, %c0_7], %7 {strides = array<i32>} : memref<8x128xf32, #tpu.memory_space<vmem>>, vector<8x128xf32>,
    return
  }
  func.func @transform_0(%arg0: i32, %arg1: i32, %arg2: i32) -> (i32, i32) {
    %c0_i32 = arith.constant 0 : i32
    return %arg0, %arg2 : i32, i32
  }
  func.func @transform_1(%arg0: i32, %arg1: i32, %arg2: i32) -> (i32, i32) {
    %c0_i32 = arith.constant 0 : i32
    return %arg1, %arg2 : i32, i32
  }
  func.func @transform_2(%arg0: i32, %arg1: i32, %arg2: i32) -> (i32, i32) {
    %c0_i32 = arith.constant 0 : i32
    %c0_i32_0 = arith.constant 0 : i32
    return %c0_i32, %arg1 : i32, i32
  }
  func.func @transform_3(%arg0: i32, %arg1: i32, %arg2: i32) -> (i32, i32) {
    %c0_i32 = arith.constant 0 : i32
    return %arg0, %arg1 : i32, i32
  }
}

</mosaic_0001>

<llo_original>
// kernel: tpu_custom_call.1
$region0: #{tpu_custom_call.1}
  #allocation0 [shape = 'u32[]', space=smem, size = 0x4, offset = 0x4, fixed_abs, tag = 'smem constant byte address 0x4 - core index']
  #allocation1 [shape = 'u32[72,128]{1,0:T(1,128)}', space=vmem, size = 0x9000, scoped, tag = 'internal scratch']
  %s0 = inlined_call_operand.hbm [shape: f32[8,32], index: 0, kind: input, shape index: {}]
  %s1 = inlined_call_operand.hbm [shape: f32[16,32], index: 1, kind: input, shape index: {}]
  %s2 = inlined_call_operand.vmem [shape: f32[1,16], index: 2, kind: input, shape index: {}]
  %s3 = inlined_call_operand.hbm [shape: f32[8,16], index: 3, kind: output, shape index: {}]
  %s4 = sld [smem:[#allocation0]]
  $region34: #{tpu_custom_call.1} parent=0
    _
  %s6 = ssub.s32 1, %s4
  %s7 = scalar_select 0, %s6, %s4
  $region1: #{tpu_custom_call.1} parent=0
    #allocation2 [shape = 'u8[4096]{0}', space=vmem, size = 0x1000, scoped, tag = 'input window, operand 0, single buffered']
    #allocation3 [shape = 's32[1]{0}', space=sflag, size = 0x4, scoped, tag = 'scoped memory for tpu_custom_call.1']
    #allocation4 [shape = 's32[1]{0}', space=sflag, size = 0x4, scoped, tag = 'scoped memory for tpu_custom_call.1']
    #allocation5 [shape = 'u8[65536]{0}', space=vmem, size = 0x10000, scoped, tag = 'input window, operand 1, single buffered']
    #allocation6 [shape = 's32[1]{0}', space=sflag, size = 0x4, scoped, tag = 'scoped memory for tpu_custom_call.1']
    #allocation7 [shape = 'u8[4096]{0}', space=vmem, size = 0x1000, scoped, tag = 'output window, operand 0, single buffered']
    %8 = vsyncpa [#allocation3], 0
    %9 = vsyncpa [#allocation6], 0
    %10 = vsyncpa [#allocation4], 0
    // Predicated region
    $region2: #{tpu_custom_call.1} parent=1 // pred_check
      _
    $region3: #{tpu_custom_call.1} parent=1 // pred_check_branch
      %12 = sbr.rel (0) target = $region5
    $region4: #{tpu_custom_call.1} parent=1 // pred_region
      %14 = vsyncadd [#allocation3], 0
      %s16 = sshll.u32 %s0, 4
      %s17 = int_to_ptr.hbm [resolvable:$true] %s16
      %s18 = sshll.u32 [#allocation2], 4
      %s19 = int_to_ptr.vmem [resolvable:$true] %s18
      %21 = dma.hbm_to_vmem [thread:$0]  %s17, 128, %s19, [#allocation3]
    $region5: #{tpu_custom_call.1} parent=1 // pred_fallthru
      _
    // Predicated region
    $region6: #{tpu_custom_call.1} parent=1 // pred_check
      _
    $region7: #{tpu_custom_call.1} parent=1 // pred_check_branch
      %23 = sbr.rel (0) target = $region9
    $region8: #{tpu_custom_call.1} parent=1 // pred_region
      %25 = vsyncadd [#allocation6], 1792
      %s26 = sshll.u32 %s1, 4
      %s27 = int_to_ptr.hbm [resolvable:$true] %s26
      %s28 = sshll.u32 [#allocation5], 4
      %s29 = int_to_ptr.vmem [resolvable:$true] %s28
      %34 = dma.hbm_to_vmem [thread:$0]  %s27, 256, %s29, [#allocation6], 128, 128, 8
    $region9: #{tpu_custom_call.1} parent=1 // pred_fallthru
      _
    // Predicated region
    $region10: #{tpu_custom_call.1} parent=1 // pred_check
      _
    $region11: #{tpu_custom_call.1} parent=1 // pred_check_branch
      %36 = sbr.rel (0) target = $region13
    $region12: #{tpu_custom_call.1} parent=1 // pred_region
      _
    $region13: #{tpu_custom_call.1} parent=1 // pred_fallthru
      _
    // Predicated region
    $region14: #{tpu_custom_call.1} parent=1 // pred_check
      _
    $region15: #{tpu_custom_call.1} parent=1 // pred_check_branch
      %38 = sbr.rel (0) target = $region17
    $region16: #{tpu_custom_call.1} parent=1 // pred_region
      %40 = dma.done [#allocation3], 128
    $region17: #{tpu_custom_call.1} parent=1 // pred_fallthru
      _
    // Predicated region
    $region18: #{tpu_custom_call.1} parent=1 // pred_check
      _
    $region19: #{tpu_custom_call.1} parent=1 // pred_check_branch
      %42 = sbr.rel (0) target = $region21
    $region20: #{tpu_custom_call.1} parent=1 // pred_region
      %44 = dma.done [#allocation6], 2048
    $region21: #{tpu_custom_call.1} parent=1 // pred_fallthru
      _
    %v45 = vld [vmem:[#allocation2] sm:$0xff]
    %v46 = vld [vmem:[#allocation5] sm:$0xff]
    %v47 = vld [vmem:[#allocation5 + $0x8] sm:$0xff]
    %v48 = vld [vmem:[#allocation5 + $0x10] sm:$0xff]
    %v49 = vld [vmem:[#allocation5 + $0x18] sm:$0xff]
    %v50 = vld [vmem:[#allocation5 + $0x20] sm:$0xff]
    %v51 = vld [vmem:[#allocation5 + $0x28] sm:$0xff]
    %v52 = vld [vmem:[#allocation5 + $0x30] sm:$0xff]
    %v53 = vld [vmem:[#allocation5 + $0x38] sm:$0xff]
    %v54 = vld [vmem:[#allocation5 + $0x40] sm:$0xff]
    %v55 = vld [vmem:[#allocation5 + $0x48] sm:$0xff]
    %v56 = vld [vmem:[#allocation5 + $0x50] sm:$0xff]
    %v57 = vld [vmem:[#allocation5 + $0x58] sm:$0xff]
    %v58 = vld [vmem:[#allocation5 + $0x60] sm:$0xff]
    %v59 = vld [vmem:[#allocation5 + $0x68] sm:$0xff]
    %v60 = vld [vmem:[#allocation5 + $0x70] sm:$0xff]
    %v61 = vld [vmem:[#allocation5 + $0x78] sm:$0xff]
    %vm62 = vcmask 261120
    %v64 = vsel %vm62, %v45, 0
    %v67 = vsel %vm62, %v46, 0
    %v70 = vsel %vm62, %v47, 0
    %v73 = vsel %vm62, %v48, 0
    %v76 = vsel %vm62, %v49, 0
    %v79 = vsel %vm62, %v50, 0
    %v82 = vsel %vm62, %v51, 0
    %v85 = vsel %vm62, %v52, 0
    %v88 = vsel %vm62, %v53, 0
    %v91 = vsel %vm62, %v54, 0
    %v94 = vsel %vm62, %v55, 0
    %v97 = vsel %vm62, %v56, 0
    %v100 = vsel %vm62, %v57, 0
    %v103 = vsel %vm62, %v58, 0
    %v106 = vsel %vm62, %v59, 0
    %v109 = vsel %vm62, %v60, 0
    %v112 = vsel %vm62, %v61, 0
    %114 = vmatpush.xpose.msra.mxu0 %v112
    %115 = vmatpush.xpose.msra.mxu0 %v109
    %116 = vmatpush.xpose.msra.mxu0 %v106
    %117 = vmatpush.xpose.msra.mxu0 %v103
    %118 = vmatpush.xpose.msra.mxu0 %v100
    %119 = vmatpush.xpose.msra.mxu0 %v97
    %120 = vmatpush.xpose.msra.mxu0 %v94
    %121 = vmatpush.xpose.msra.mxu0 %v91
    %122 = vmatpush.xpose.msra.mxu0 %v88
    %123 = vmatpush.xpose.msra.mxu0 %v85
    %124 = vmatpush.xpose.msra.mxu0 %v82
    %125 = vmatpush.xpose.msra.mxu0 %v79
    %126 = vmatpush.xpose.msra.mxu0 %v76
    %127 = vmatpush.xpose.msra.mxu0 %v73
    %128 = vmatpush.xpose.msra.mxu0 %v70
    %129 = vmatpush.xpose.msra.mxu0 %v67
    %130 = vmatmul.f32.gmra.mxu0 %v64
    %v131 = vpop.f32.mrf.mxu0
    %v132 = vadd.f32 0.0, %v131
    %133 = vdwg.mxu0
    %p134 = scmp.eq.s32.totalorder 0, 0
    // Predicated region
    $region22: #{tpu_custom_call.1} parent=1 // pred_check
      %p135 = pneg %p134
    $region23: #{tpu_custom_call.1} parent=1 // pred_check_branch
      %137 = sbr.rel (%p135) target = $region25
    $region24: #{tpu_custom_call.1} parent=1 // pred_region
      %v138 = vld [vmem:[%s2] sm:$0x1]
      %v140 = vperm.slane %v138, 0
      %142 = vst [vmem:[#allocation7] sm:$0xff] %v140
    $region25: #{tpu_custom_call.1} parent=1 // pred_fallthru
      _
    %v143 = vld [vmem:[#allocation7] sm:$0xff]
    %v144 = vadd.f32 %v143, %v132
    %145 = vst [vmem:[#allocation7] sm:$0xff] %v144
    // Predicated region
    $region26: #{tpu_custom_call.1} parent=1 // pred_check
      _
    $region27: #{tpu_custom_call.1} parent=1 // pred_check_branch
      %147 = sbr.rel (0) target = $region29
    $region28: #{tpu_custom_call.1} parent=1 // pred_region
      %149 = vsyncadd [#allocation4], 0
      %s151 = sshll.u32 [#allocation7], 4
      %s152 = int_to_ptr.vmem [resolvable:$true] %s151
      %s153 = sshll.u32 %s3, 4
      %s154 = int_to_ptr.hbm [resolvable:$true] %s153
      %156 = dma.vmem_to_hbm [thread:$0]  %s152, 128, %s154, [#allocation4]
    $region29: #{tpu_custom_call.1} parent=1 // pred_fallthru
      _
    // Predicated region
    $region30: #{tpu_custom_call.1} parent=1 // pred_check
      _
    $region31: #{tpu_custom_call.1} parent=1 // pred_check_branch
      %158 = sbr.rel (0) target = $region33
    $region32: #{tpu_custom_call.1} parent=1 // pred_region
      %160 = dma.done [#allocation4], 128
    $region33: #{tpu_custom_call.1} parent=1 // pred_fallthru
      _
    %161 = vsyncpa [#allocation3], 1
    %162 = vsyncpa [#allocation6], 1
    %163 = vsyncpa [#allocation4], 1

</llo_original>
